<compile_context>
chip_gen: v5e
topology: v5e:2x2
jax: 0.10.0
libtpu: 0.0.40
codegen_flags: <defaults>
</compile_context>

<pallas_src>
import jax
import jax.numpy as jnp
from jax.experimental import pallas as pl
from jax.experimental.pallas import tpu as pltpu


def _silu(x):
    # silu(x) = x * sigmoid(x); sigmoid via a single tanh -> one EUP push.
    return x * (0.5 * jnp.tanh(0.5 * x) + 0.5)


def _round_up(n, m):
    return ((n + m - 1) // m) * m


def actor_kernel(x_ref, w1_ref, w2_ref, pack_ref, o_ref):
    # x_ref   : [TILE_B, in_dim] f32   (batch-major, exactly as stored in HBM)
    # w1_ref  : [128, in_dim]    bf16
    # w2_ref  : [128, 128]       bf16
    # pack_ref: [128, 4]         f32   col0=b1, col1=b2, col2=w3 (as column), col3=b3
    # o_ref   : [1, TILE_B]      f32   (batch on the lane axis -> unmasked vst)
    x_bf = x_ref[...].astype(jnp.bfloat16)
    pack = pack_ref[...]
    b1 = pack[:, 0:1]
    b2 = pack[:, 1:2]
    w3c = pack[:, 2:3]
    b3 = pack[0:1, 3:4]

    # Layer 1: contract last dims of both operands (w1 . x^T) -> [128, TILE_B].
    # Keeps the batch on the lane axis without any wrapper/in-kernel transpose pass.
    h1 = jax.lax.dot_general(
        w1_ref[...], x_bf,
        dimension_numbers=(((1,), (1,)), ((), ())),
        preferred_element_type=jnp.float32,
    )
    h1 = _silu(h1 + b1)                                            # f32 activations

    # Layer 2: [128,128] bf16 @ [128, TILE_B] bf16 -> f32 accumulate.
    h2 = jnp.dot(w2_ref[...], h1.astype(jnp.bfloat16),
                 preferred_element_type=jnp.float32)
    h2 = _silu(h2 + b2)

    # Layer 3 (out_features=1): VPU multiply + reduce over the 128 hidden rows
    # (M=1 would waste the MXU and force a third weight swap per step).
    h3 = jnp.sum(h2 * w3c, axis=0, keepdims=True)                  # [1, TILE_B]
    o_ref[...] = jnp.tanh(h3 + b3)


def actor_forward(x, params, tile_b=2048):
    """x: [B, in_dim] f32 -> [B, 1] f32 (matches PyTorch Actor.forward)."""
    w1, b1, w2, b2, w3, b3 = params
    B, in_dim = x.shape
    hidden = w1.shape[0]

    # Batch ends up on the 128-wide lane axis inside the kernel.
    tb = tile_b if B >= tile_b else _round_up(B, 128)
    Bp = _round_up(B, tb)
    xp = jnp.pad(x, ((0, Bp - B), (0, 0)))          # [Bp, in_dim]; no transpose pass

    # Tiny packed parameter slab (VMEM-resident across the whole grid).
    pack = jnp.concatenate(
        [b1[:, None].astype(jnp.float32),
         b2[:, None].astype(jnp.float32),
         w3.reshape(hidden, 1).astype(jnp.float32),
         jnp.broadcast_to(b3, (hidden, 1)).astype(jnp.float32)],
        axis=1)                                                    # [128, 4]

    out = pl.pallas_call(
        actor_kernel,
        out_shape=jax.ShapeDtypeStruct((1, Bp), jnp.float32),
        grid=(Bp // tb,),
        in_specs=[
            pl.BlockSpec((tb, in_dim), lambda i: (i, 0)),        # x tile: pipelined
            pl.BlockSpec((hidden, in_dim), lambda i: (0, 0)),    # w1 (bf16): resident
            pl.BlockSpec((hidden, hidden), lambda i: (0, 0)),    # w2 (bf16): resident
            pl.BlockSpec((hidden, 4), lambda i: (0, 0)),         # b1|b2|w3|b3: resident
        ],
        out_specs=pl.BlockSpec((1, tb), lambda i: (0, i)),       # lane-dense output
        compiler_params=pltpu.CompilerParams(
            dimension_semantics=("parallel",),                   # megacore on v7x
        ),
    )(xp, w1.astype(jnp.bfloat16), w2.astype(jnp.bfloat16), pack)

    return out[0, :B].reshape(B, 1)


def init_params(key, in_dim=4, hidden=128):
    # PyTorch nn.Linear default init: U(-1/sqrt(fan_in), +1/sqrt(fan_in)),
    # weights stored PyTorch-native [out_features, in_features], all f32.
    ks = jax.random.split(key, 6)

    def unif(k, shape, fan_in):
        bound = 1.0 / jnp.sqrt(fan_in)
        return jax.random.uniform(k, shape, jnp.float32, -bound, bound)

    w1 = unif(ks[0], (hidden, in_dim), in_dim)
    b1 = unif(ks[1], (hidden,), in_dim)
    w2 = unif(ks[2], (hidden, hidden), hidden)
    b2 = unif(ks[3], (hidden,), hidden)
    w3 = unif(ks[4], (1, hidden), hidden)
    b3 = unif(ks[5], (), hidden)
    return (w1, b1, w2, b2, w3, b3)


def actor_ref(x, params):
    # Pure-JAX f32 reference (HIGHEST matmul precision). The kernel uses bf16
    # matmul inputs, so tolerances below are loosened accordingly.
    w1, b1, w2, b2, w3, b3 = params
    mm = lambda a, b: jnp.dot(a, b, precision=jax.lax.Precision.HIGHEST)
    silu = lambda v: v * jax.nn.sigmoid(v)
    h = silu(mm(x, w1.T) + b1)
    h = silu(mm(h, w2.T) + b2)
    return jnp.tanh(mm(h, w3.T) + b3)


if __name__ == "__main__":
    key = jax.random.PRNGKey(0)
    kx, kp, kx2 = jax.random.split(key, 3)

    in_dim, hidden = 4, 128
    params = init_params(kp, in_dim=in_dim, hidden=hidden)

    # Small batch (pads up to a single 128-lane tile).
    B = 8
    x = jax.random.normal(kx, (B, in_dim), jnp.float32)
    out = jax.block_until_ready(actor_forward(x, params))
    ref = actor_ref(x, params)
    assert out.shape == (B, 1), out.shape
    assert jnp.allclose(out, ref, atol=2e-2, rtol=2e-2), "mismatch vs reference (B=8)"

    # Ragged larger batch exercises the multi-step grid + padding path.
    B2 = 1000
    x2 = jax.random.normal(kx2, (B2, in_dim), jnp.float32)
    out2 = jax.block_until_ready(actor_forward(x2, params, tile_b=256))
    ref2 = actor_ref(x2, params)
    assert out2.shape == (B2, 1), out2.shape
    assert jnp.allclose(out2, ref2, atol=2e-2, rtol=2e-2), "mismatch vs reference (B=1000)"

    print("KERNEL_OK")
</pallas_src>

<mosaic_0001>
module attributes {stable_mosaic.version = 11 : i64} {
  func.func @actor_kernel(%arg0: i32, %arg1: memref<128x4xf32, #tpu.memory_space<vmem>>, %arg2: memref<128x4xbf16, #tpu.memory_space<vmem>>, %arg3: memref<128x128xbf16, #tpu.memory_space<vmem>>, %arg4: memref<128x4xf32, #tpu.memory_space<vmem>>, %arg5: memref<1x128xf32, #tpu.memory_space<vmem>>) attributes {dimension_semantics = [#tpu.dimension_semantics<parallel>], iteration_bounds = array<i64: 1>, scalar_prefetch = 0 : i64, scratch_operands = 0 : i64, tpu.core_type = #tpu.core_type<tc>, window_params = [{transform_indices = @transform_0, window_bounds = array<i64: 128, 4>}, {pipeline_mode = #tpu.pipeline_mode<synchronous>, transform_indices = @transform_1, window_bounds = array<i64: 128, 4>}, {pipeline_mode = #tpu.pipeline_mode<synchronous>, transform_indices = @transform_2, window_bounds = array<i64: 128, 128>}, {pipeline_mode = #tpu.pipeline_mode<synchronous>, transform_indices = @transform_3, window_bounds = array<i64: 128, 4>}, {transform_indices = @transform_4, window_bounds = array<i64: 1, 128>}]} {
    %c0 = arith.constant 0 : index
    %c0_0 = arith.constant 0 : index
    %0 = vector.load %arg1[%c0, %c0_0] : memref<128x4xf32, #tpu.memory_space<vmem>>, vector<128x4xf32>
    %1 = arith.truncf %0 : vector<128x4xf32> to vector<128x4xbf16>
    %c0_1 = arith.constant 0 : index
    %c0_2 = arith.constant 0 : index
    %2 = vector.load %arg4[%c0_1, %c0_2] : memref<128x4xf32, #tpu.memory_space<vmem>>, vector<128x4xf32>
    %3 = vector.extract_strided_slice %2 {offsets = [0, 0], sizes = [128, 1], strides = [1, 1]} : vector<128x4xf32> to vector<128x1xf32>
    %4 = vector.extract_strided_slice %2 {offsets = [0, 1], sizes = [128, 1], strides = [1, 1]} : vector<128x4xf32> to vector<128x1xf32>
    %5 = vector.extract_strided_slice %2 {offsets = [0, 2], sizes = [128, 1], strides = [1, 1]} : vector<128x4xf32> to vector<128x1xf32>
    %6 = vector.extract_strided_slice %2 {offsets = [0, 3], sizes = [1, 1], strides = [1, 1]} : vector<128x4xf32> to vector<1x1xf32>
    %c0_3 = arith.constant 0 : index
    %c0_4 = arith.constant 0 : index
    %7 = vector.load %arg2[%c0_3, %c0_4] : memref<128x4xbf16, #tpu.memory_space<vmem>>, vector<128x4xbf16>
    %cst = arith.constant dense<0.000000e+00> : vector<128x128xf32>
    %8 = tpu.matmul %7, %1, %cst {dimension_numbers = #tpu.dot_dimension_numbers<[1], [1], [0], [0], [0, 0, 1, 0], [], []>} : vector<128x4xbf16>, vector<128x4xbf16>, vector<128x128xf32> -> vector<128x128xf32>
    %9 = vector.broadcast %3 : vector<128x1xf32> to vector<128x128xf32>
    %10 = arith.addf %8, %9 : vector<128x128xf32>
    %cst_5 = arith.constant 5.000000e-01 : f32
    %11 = vector.broadcast %cst_5 : f32 to vector<128x128xf32>
    %12 = arith.mulf %11, %10 : vector<128x128xf32>
    %13 = math.tanh %12 : vector<128x128xf32>
    %cst_6 = arith.constant 5.000000e-01 : f32
    %14 = vector.broadcast %cst_6 : f32 to vector<128x128xf32>
    %15 = arith.mulf %14, %13 : vector<128x128xf32>
    %cst_7 = arith.constant 5.000000e-01 : f32
    %16 = vector.broadcast %cst_7 : f32 to vector<128x128xf32>
    %17 = arith.addf %15, %16 : vector<128x128xf32>
    %18 = arith.mulf %10, %17 : vector<128x128xf32>
    %c0_8 = arith.constant 0 : index
    %c0_9 = arith.constant 0 : index
    %19 = vector.load %arg3[%c0_8, %c0_9] : memref<128x128xbf16, #tpu.memory_space<vmem>>, vector<128x128xbf16>
    %20 = arith.truncf %18 : vector<128x128xf32> to vector<128x128xbf16>
    %cst_10 = arith.constant dense<0.000000e+00> : vector<128x128xf32>
    %21 = tpu.matmul %19, %20, %cst_10 {dimension_numbers = #tpu.dot_dimension_numbers<[1], [0], [0], [1], [0, 0, 1, 1], [], []>} : vector<128x128xbf16>, vector<128x128xbf16>, vector<128x128xf32> -> vector<128x128xf32>
    %22 = vector.broadcast %4 : vector<128x1xf32> to vector<128x128xf32>
    %23 = arith.addf %21, %22 : vector<128x128xf32>
    %cst_11 = arith.constant 5.000000e-01 : f32
    %24 = vector.broadcast %cst_11 : f32 to vector<128x128xf32>
    %25 = arith.mulf %24, %23 : vector<128x128xf32>
    %26 = math.tanh %25 : vector<128x128xf32>
    %cst_12 = arith.constant 5.000000e-01 : f32
    %27 = vector.broadcast %cst_12 : f32 to vector<128x128xf32>
    %28 = arith.mulf %27, %26 : vector<128x128xf32>
    %cst_13 = arith.constant 5.000000e-01 : f32
    %29 = vector.broadcast %cst_13 : f32 to vector<128x128xf32>
    %30 = arith.addf %28, %29 : vector<128x128xf32>
    %31 = arith.mulf %23, %30 : vector<128x128xf32>
    %32 = vector.broadcast %5 : vector<128x1xf32> to vector<128x128xf32>
    %33 = arith.mulf %31, %32 : vector<128x128xf32>
    %cst_14 = arith.constant dense<0.000000e+00> : vector<128xf32>
    %34 = vector.multi_reduction <add>, %33, %cst_14 [0] : vector<128x128xf32> to vector<128xf32>
    %35 = vector.shape_cast %34 : vector<128xf32> to vector<1x128xf32>
    %36 = vector.broadcast %6 : vector<1x1xf32> to vector<1x128xf32>
    %37 = arith.addf %35, %36 : vector<1x128xf32>
    %38 = math.tanh %37 : vector<1x128xf32>
    %c0_15 = arith.constant 0 : index
    %c0_16 = arith.constant 0 : index
    %39 = vector.load %arg5[%c0_15, %c0_16] : memref<1x128xf32, #tpu.memory_space<vmem>>, vector<1x128xf32>
    tpu.vector_store %arg5[%c0_15, %c0_16], %38 {strides = array<i32>} : memref<1x128xf32, #tpu.memory_space<vmem>>, vector<1x128xf32>,
    return
  }
  func.func @transform_0(%arg0: i32) -> (i32, i32) {
    %c0_i32 = arith.constant 0 : i32
    %c0_i32_0 = arith.constant 0 : i32
    return %arg0, %c0_i32 : i32, i32
  }
  func.func @transform_1(%arg0: i32) -> (i32, i32) {
    %c0_i32 = arith.constant 0 : i32
    %c0_i32_0 = arith.constant 0 : i32
    %c0_i32_1 = arith.constant 0 : i32
    return %c0_i32, %c0_i32_0 : i32, i32
  }
  func.func @transform_2(%arg0: i32) -> (i32, i32) {
    %c0_i32 = arith.constant 0 : i32
    %c0_i32_0 = arith.constant 0 : i32
    %c0_i32_1 = arith.constant 0 : i32
    return %c0_i32, %c0_i32_0 : i32, i32
  }
  func.func @transform_3(%arg0: i32) -> (i32, i32) {
    %c0_i32 = arith.constant 0 : i32
    %c0_i32_0 = arith.constant 0 : i32
    %c0_i32_1 = arith.constant 0 : i32
    return %c0_i32, %c0_i32_0 : i32, i32
  }
  func.func @transform_4(%arg0: i32) -> (i32, i32) {
    %c0_i32 = arith.constant 0 : i32
    %c0_i32_0 = arith.constant 0 : i32
    return %c0_i32, %arg0 : i32, i32
  }
}

</mosaic_0001>

<llo_original>
// kernel: tpu_custom_call.1
$region0: #{tpu_custom_call.1}
  #allocation0 [shape = 'u32[]', space=smem, size = 0x4, offset = 0x4, fixed_abs, tag = 'smem constant byte address 0x4 - core index']
  #allocation1 [shape = 'u32[72,128]{1,0:T(1,128)}', space=vmem, size = 0x9000, scoped, tag = 'internal scratch']
  %s0 = inlined_call_operand.vmem [shape: f32[128,4], index: 0, kind: input, shape index: {}]
  %s1 = inlined_call_operand.vmem [shape: bf16[128,4], index: 1, kind: input, shape index: {}]
  %s2 = inlined_call_operand.vmem [shape: bf16[128,128], index: 2, kind: input, shape index: {}]
  %s3 = inlined_call_operand.vmem [shape: f32[128,4], index: 3, kind: input, shape index: {}]
  %s4 = inlined_call_operand.hbm [shape: f32[1,128], index: 4, kind: output, shape index: {}]
  %s5 = sld [smem:[#allocation0]]
  $region26: #{tpu_custom_call.1} parent=0
    _
  %s7 = ssub.s32 1, %s5
  %s8 = scalar_select 0, %s7, %s5
  $region1: #{tpu_custom_call.1} parent=0
    #allocation2 [shape = 'u8[512]{0}', space=vmem, size = 0x400, scoped, tag = 'output window, operand 0, single buffered']
    #allocation3 [shape = 's32[1]{0}', space=sflag, size = 0x4, scoped, tag = 'scoped memory for tpu_custom_call.1']
    %9 = vsyncpa [#allocation3], 0
    // Predicated region
    $region2: #{tpu_custom_call.1} parent=1 // pred_check
      _
    $region3: #{tpu_custom_call.1} parent=1 // pred_check_branch
      %11 = sbr.rel (0) target = $region5
    $region4: #{tpu_custom_call.1} parent=1 // pred_region
      _
    $region5: #{tpu_custom_call.1} parent=1 // pred_fallthru
      _
    // Predicated region
    $region6: #{tpu_custom_call.1} parent=1 // pred_check
      _
    $region7: #{tpu_custom_call.1} parent=1 // pred_check_branch
      %13 = sbr.rel (0) target = $region9
    $region8: #{tpu_custom_call.1} parent=1 // pred_region
      _
    $region9: #{tpu_custom_call.1} parent=1 // pred_fallthru
      _
    // Predicated region
    $region10: #{tpu_custom_call.1} parent=1 // pred_check
      _
    $region11: #{tpu_custom_call.1} parent=1 // pred_check_branch
      %15 = sbr.rel (0) target = $region13
    $region12: #{tpu_custom_call.1} parent=1 // pred_region
      _
    $region13: #{tpu_custom_call.1} parent=1 // pred_fallthru
      _
    // Predicated region
    $region14: #{tpu_custom_call.1} parent=1 // pred_check
      _
    $region15: #{tpu_custom_call.1} parent=1 // pred_check_branch
      %17 = sbr.rel (0) target = $region17
    $region16: #{tpu_custom_call.1} parent=1 // pred_region
      _
    $region17: #{tpu_custom_call.1} parent=1 // pred_fallthru
      _
    %v18 = vld [vmem:[%s0] sm:$0xff]
    %v19 = vld [vmem:[%s0 + $0x8] sm:$0xff]
    %v20 = vld [vmem:[%s0 + $0x10] sm:$0xff]
    %v21 = vld [vmem:[%s0 + $0x18] sm:$0xff]
    %v22 = vld [vmem:[%s0 + $0x20] sm:$0xff]
    %v23 = vld [vmem:[%s0 + $0x28] sm:$0xff]
    %v24 = vld [vmem:[%s0 + $0x30] sm:$0xff]
    %v25 = vld [vmem:[%s0 + $0x38] sm:$0xff]
    %v26 = vld [vmem:[%s0 + $0x40] sm:$0xff]
    %v27 = vld [vmem:[%s0 + $0x48] sm:$0xff]
    %v28 = vld [vmem:[%s0 + $0x50] sm:$0xff]
    %v29 = vld [vmem:[%s0 + $0x58] sm:$0xff]
    %v30 = vld [vmem:[%s0 + $0x60] sm:$0xff]
    %v31 = vld [vmem:[%s0 + $0x68] sm:$0xff]
    %v32 = vld [vmem:[%s0 + $0x70] sm:$0xff]
    %v33 = vld [vmem:[%s0 + $0x78] sm:$0xff]
    %v34 = vpack.c.bf16 %v19, %v18
    %v35 = vpack.c.bf16 %v21, %v20
    %v36 = vpack.c.bf16 %v23, %v22
    %v37 = vpack.c.bf16 %v25, %v24
    %v38 = vpack.c.bf16 %v27, %v26
    %v39 = vpack.c.bf16 %v29, %v28
    %v40 = vpack.c.bf16 %v31, %v30
    %v41 = vpack.c.bf16 %v33, %v32
    %v42 = vld [vmem:[%s3] sm:$0xff]
    %v43 = vld [vmem:[%s3 + $0x8] sm:$0xff]
    %v44 = vld [vmem:[%s3 + $0x10] sm:$0xff]
    %v45 = vld [vmem:[%s3 + $0x18] sm:$0xff]
    %v46 = vld [vmem:[%s3 + $0x20] sm:$0xff]
    %v47 = vld [vmem:[%s3 + $0x28] sm:$0xff]
    %v48 = vld [vmem:[%s3 + $0x30] sm:$0xff]
    %v49 = vld [vmem:[%s3 + $0x38] sm:$0xff]
    %v50 = vld [vmem:[%s3 + $0x40] sm:$0xff]
    %v51 = vld [vmem:[%s3 + $0x48] sm:$0xff]
    %v52 = vld [vmem:[%s3 + $0x50] sm:$0xff]
    %v53 = vld [vmem:[%s3 + $0x58] sm:$0xff]
    %v54 = vld [vmem:[%s3 + $0x60] sm:$0xff]
    %v55 = vld [vmem:[%s3 + $0x68] sm:$0xff]
    %v56 = vld [vmem:[%s3 + $0x70] sm:$0xff]
    %v57 = vld [vmem:[%s3 + $0x78] sm:$0xff]
    %v58 = vld [vmem:[%s1] sm:$0xf]
    %v59 = vld [vmem:[%s1 + $0x4] sm:$0xf]
    %v60 = vld [vmem:[%s1 + $0x8] sm:$0xf]
    %v61 = vld [vmem:[%s1 + $0xc] sm:$0xf]
    %v62 = vld [vmem:[%s1 + $0x10] sm:$0xf]
    %v63 = vld [vmem:[%s1 + $0x14] sm:$0xf]
    %v64 = vld [vmem:[%s1 + $0x18] sm:$0xf]
    %v65 = vld [vmem:[%s1 + $0x1c] sm:$0xf]
    %v66 = vld [vmem:[%s1 + $0x20] sm:$0xf]
    %v67 = vld [vmem:[%s1 + $0x24] sm:$0xf]
    %v68 = vld [vmem:[%s1 + $0x28] sm:$0xf]
    %v69 = vld [vmem:[%s1 + $0x2c] sm:$0xf]
    %v70 = vld [vmem:[%s1 + $0x30] sm:$0xf]
    %v71 = vld [vmem:[%s1 + $0x34] sm:$0xf]
    %v72 = vld [vmem:[%s1 + $0x38] sm:$0xf]
    %v73 = vld [vmem:[%s1 + $0x3c] sm:$0xf]
    %75 = vset.pattern.permute.xlu0 0
    %76 = vperm.xlu0 %75, %v42
    %v77 = vpop.permute.xlu0 %76
    %80 = vset.pattern.permute.xlu0 0
    %81 = vperm.xlu0 %80, %v43
    %v82 = vpop.permute.xlu0 %81
    %85 = vset.pattern.permute.xlu0 0
    %86 = vperm.xlu0 %85, %v44
    %v87 = vpop.permute.xlu0 %86
    %90 = vset.pattern.permute.xlu0 0
    %91 = vperm.xlu0 %90, %v45
    %v92 = vpop.permute.xlu0 %91
    %95 = vset.pattern.permute.xlu0 0
    %96 = vperm.xlu0 %95, %v46
    %v97 = vpop.permute.xlu0 %96
    %100 = vset.pattern.permute.xlu0 0
    %101 = vperm.xlu0 %100, %v47
    %v102 = vpop.permute.xlu0 %101
    %105 = vset.pattern.permute.xlu0 0
    %106 = vperm.xlu0 %105, %v48
    %v107 = vpop.permute.xlu0 %106
    %110 = vset.pattern.permute.xlu0 0
    %111 = vperm.xlu0 %110, %v49
    %v112 = vpop.permute.xlu0 %111
    %115 = vset.pattern.permute.xlu0 0
    %116 = vperm.xlu0 %115, %v50
    %v117 = vpop.permute.xlu0 %116
    %120 = vset.pattern.permute.xlu0 0
    %121 = vperm.xlu0 %120, %v51
    %v122 = vpop.permute.xlu0 %121
    %125 = vset.pattern.permute.xlu0 0
    %126 = vperm.xlu0 %125, %v52
    %v127 = vpop.permute.xlu0 %126
    %130 = vset.pattern.permute.xlu0 0
    %131 = vperm.xlu0 %130, %v53
    %v132 = vpop.permute.xlu0 %131
    %135 = vset.pattern.permute.xlu0 0
    %136 = vperm.xlu0 %135, %v54
    %v137 = vpop.permute.xlu0 %136
    %140 = vset.pattern.permute.xlu0 0
    %141 = vperm.xlu0 %140, %v55
    %v142 = vpop.permute.xlu0 %141
    %145 = vset.pattern.permute.xlu0 0
    %146 = vperm.xlu0 %145, %v56
    %v147 = vpop.permute.xlu0 %146
    %150 = vset.pattern.permute.xlu0 0
    %151 = vperm.xlu0 %150, %v57
    %v152 = vpop.permute.xlu0 %151
    %v170 = vunpack.c.l.b16 %v58
    %v171 = vunpack.c.l.b16 %v59
    %v172 = vunpack.c.l.b16 %v60
    %v173 = vunpack.c.l.b16 %v61
    %v174 = vunpack.c.l.b16 %v62
    %v175 = vunpack.c.l.b16 %v63
    %v176 = vunpack.c.l.b16 %v64
    %v177 = vunpack.c.l.b16 %v65
    %v178 = vunpack.c.l.b16 %v66
    %v179 = vunpack.c.l.b16 %v67
    %v180 = vunpack.c.l.b16 %v68
    %v181 = vunpack.c.l.b16 %v69
    %v182 = vunpack.c.l.b16 %v70
    %v183 = vunpack.c.l.b16 %v71
    %v184 = vunpack.c.l.b16 %v72
    %v185 = vunpack.c.l.b16 %v73
    %v186 = vpack.c.b16 %v171, %v170
    %v187 = vpack.c.b16 %v173, %v172
    %v188 = vpack.c.b16 %v175, %v174
    %v189 = vpack.c.b16 %v177, %v176
    %v190 = vpack.c.b16 %v179, %v178
    %v191 = vpack.c.b16 %v181, %v180
    %v192 = vpack.c.b16 %v183, %v182
    %v193 = vpack.c.b16 %v185, %v184
    %vm194 = vcmask 31744
    %v196 = vsel %vm194, %v186, 0
    %v199 = vsel %vm194, %v187, 0
    %v202 = vsel %vm194, %v188, 0
    %v205 = vsel %vm194, %v189, 0
    %v208 = vsel %vm194, %v190, 0
    %v211 = vsel %vm194, %v191, 0
    %v214 = vsel %vm194, %v192, 0
    %v217 = vsel %vm194, %v193, 0
    %v220 = vsel %vm194, %v34, 0
    %v223 = vsel %vm194, %v35, 0
    %v226 = vsel %vm194, %v36, 0
    %v229 = vsel %vm194, %v37, 0
    %v232 = vsel %vm194, %v38, 0
    %v235 = vsel %vm194, %v39, 0
    %v238 = vsel %vm194, %v40, 0
    %v241 = vsel %vm194, %v41, 0
    %243 = vmatpush.bf16.xpose.msra.mxu0 %v241
    %244 = vmatpush.bf16.xpose.msra.mxu0 %v238
    %245 = vmatpush.bf16.xpose.msra.mxu0 %v235
    %246 = vmatpush.bf16.xpose.msra.mxu0 %v232
    %247 = vmatpush.bf16.xpose.msra.mxu0 %v229
    %248 = vmatpush.bf16.xpose.msra.mxu0 %v226
    %249 = vmatpush.bf16.xpose.msra.mxu0 %v223
    %250 = vmatpush.bf16.xpose.msra.mxu0 %v220
    %251 = vmatmul.bf16.gmra.mxu0 %v196
    %v252 = vpop.f32.mrf.mxu0
    %v253 = vadd.f32 %v77, %v252
    %v254 = vpop.f32.mrf.mxu0
    %v255 = vadd.f32 %v82, %v254
    %256 = vmatmul.bf16.gmra.mxu0 %v199
    %v257 = vpop.f32.mrf.mxu0
    %v258 = vadd.f32 %v87, %v257
    %v259 = vpop.f32.mrf.mxu0
    %v260 = vadd.f32 %v92, %v259
    %261 = vmatmul.bf16.gmra.mxu0 %v202
    %v262 = vpop.f32.mrf.mxu0
    %v263 = vadd.f32 %v97, %v262
    %v264 = vpop.f32.mrf.mxu0
    %v265 = vadd.f32 %v102, %v264
    %266 = vmatmul.bf16.gmra.mxu0 %v205
    %v267 = vpop.f32.mrf.mxu0
    %v268 = vadd.f32 %v107, %v267
    %v269 = vpop.f32.mrf.mxu0
    %v270 = vadd.f32 %v112, %v269
    %271 = vmatmul.bf16.gmra.mxu0 %v208
    %v272 = vpop.f32.mrf.mxu0
    %v273 = vadd.f32 %v117, %v272
    %v274 = vpop.f32.mrf.mxu0
    %v275 = vadd.f32 %v122, %v274
    %276 = vmatmul.bf16.gmra.mxu0 %v211
    %v277 = vpop.f32.mrf.mxu0
    %v278 = vadd.f32 %v127, %v277
    %v279 = vpop.f32.mrf.mxu0
    %v280 = vadd.f32 %v132, %v279
    %281 = vmatmul.bf16.gmra.mxu0 %v214
    %v282 = vpop.f32.mrf.mxu0
    %v283 = vadd.f32 %v137, %v282
    %v284 = vpop.f32.mrf.mxu0
    %v285 = vadd.f32 %v142, %v284
    %286 = vmatmul.bf16.gmra.mxu0 %v217
    %v287 = vpop.f32.mrf.mxu0
    %v288 = vadd.f32 %v147, %v287
    %v289 = vpop.f32.mrf.mxu0
    %v290 = vadd.f32 %v152, %v289
    %291 = vdwg.mxu0
    %v292 = vmul.f32 %v253, 0.5
    %v293 = vmul.f32 %v255, 0.5
    %v294 = vmul.f32 %v258, 0.5
    %v295 = vmul.f32 %v260, 0.5
    %v296 = vmul.f32 %v263, 0.5
    %v297 = vmul.f32 %v265, 0.5
    %v298 = vmul.f32 %v268, 0.5
    %v299 = vmul.f32 %v270, 0.5
    %v300 = vmul.f32 %v273, 0.5
    %v301 = vmul.f32 %v275, 0.5
    %v302 = vmul.f32 %v278, 0.5
    %v303 = vmul.f32 %v280, 0.5
    %v304 = vmul.f32 %v283, 0.5
    %v305 = vmul.f32 %v285, 0.5
    %v306 = vmul.f32 %v288, 0.5
    %v307 = vmul.f32 %v290, 0.5
    %v308 = vtanh.pop %v292
    %v309 = vtanh.pop %v293
    %v310 = vtanh.pop %v294
    %v311 = vtanh.pop %v295
    %v312 = vtanh.pop %v296
    %v313 = vtanh.pop %v297
    %v314 = vtanh.pop %v298
    %v315 = vtanh.pop %v299
    %v316 = vtanh.pop %v300
    %v317 = vtanh.pop %v301
    %v318 = vtanh.pop %v302
    %v319 = vtanh.pop %v303
    %v320 = vtanh.pop %v304
    %v321 = vtanh.pop %v305
    %v322 = vtanh.pop %v306
    %v323 = vtanh.pop %v307
    %v324 = vmul.f32 %v308, 0.5
    %v325 = vmul.f32 %v309, 0.5
    %v326 = vmul.f32 %v310, 0.5
    %v327 = vmul.f32 %v311, 0.5
    %v328 = vmul.f32 %v312, 0.5
    %v329 = vmul.f32 %v313, 0.5
    %v330 = vmul.f32 %v314, 0.5
    %v331 = vmul.f32 %v315, 0.5
    %v332 = vmul.f32 %v316, 0.5
    %v333 = vmul.f32 %v317, 0.5
    %v334 = vmul.f32 %v318, 0.5
    %v335 = vmul.f32 %v319, 0.5
    %v336 = vmul.f32 %v320, 0.5
    %v337 = vmul.f32 %v321, 0.5
    %v338 = vmul.f32 %v322, 0.5
    %v339 = vmul.f32 %v323, 0.5
    %v340 = vadd.f32 %v324, 0.5
    %v341 = vadd.f32 %v325, 0.5
    %v342 = vadd.f32 %v326, 0.5
    %v343 = vadd.f32 %v327, 0.5
    %v344 = vadd.f32 %v328, 0.5
    %v345 = vadd.f32 %v329, 0.5
    %v346 = vadd.f32 %v330, 0.5
    %v347 = vadd.f32 %v331, 0.5
    %v348 = vadd.f32 %v332, 0.5
    %v349 = vadd.f32 %v333, 0.5
    %v350 = vadd.f32 %v334, 0.5
    %v351 = vadd.f32 %v335, 0.5
    %v352 = vadd.f32 %v336, 0.5
    %v353 = vadd.f32 %v337, 0.5
    %v354 = vadd.f32 %v338, 0.5
    %v355 = vadd.f32 %v339, 0.5
    %v356 = vmul.f32 %v253, %v340
    %v357 = vmul.f32 %v255, %v341
    %v358 = vmul.f32 %v258, %v342
    %v359 = vmul.f32 %v260, %v343
    %v360 = vmul.f32 %v263, %v344
    %v361 = vmul.f32 %v265, %v345
    %v362 = vmul.f32 %v268, %v346
    %v363 = vmul.f32 %v270, %v347
    %v364 = vmul.f32 %v273, %v348
    %v365 = vmul.f32 %v275, %v349
    %v366 = vmul.f32 %v278, %v350
    %v367 = vmul.f32 %v280, %v351
    %v368 = vmul.f32 %v283, %v352
    %v369 = vmul.f32 %v285, %v353
    %v370 = vmul.f32 %v288, %v354
    %v371 = vmul.f32 %v290, %v355
    %v372 = vld [vmem:[%s2] sm:$0xf]
    %v373 = vld [vmem:[%s2 + $0x4] sm:$0xf]
    %v374 = vld [vmem:[%s2 + $0x8] sm:$0xf]
    %v375 = vld [vmem:[%s2 + $0xc] sm:$0xf]
    %v376 = vld [vmem:[%s2 + $0x10] sm:$0xf]
    %v377 = vld [vmem:[%s2 + $0x14] sm:$0xf]
    %v378 = vld [vmem:[%s2 + $0x18] sm:$0xf]
    %v379 = vld [vmem:[%s2 + $0x1c] sm:$0xf]
    %v380 = vld [vmem:[%s2 + $0x20] sm:$0xf]
    %v381 = vld [vmem:[%s2 + $0x24] sm:$0xf]
    %v382 = vld [vmem:[%s2 + $0x28] sm:$0xf]
    %v383 = vld [vmem:[%s2 + $0x2c] sm:$0xf]
    %v384 = vld [vmem:[%s2 + $0x30] sm:$0xf]
    %v385 = vld [vmem:[%s2 + $0x34] sm:$0xf]
    %v386 = vld [vmem:[%s2 + $0x38] sm:$0xf]
    %v387 = vld [vmem:[%s2 + $0x3c] sm:$0xf]
    %v388 = vpack.c.bf16 %v357, %v356
    %v389 = vpack.c.bf16 %v359, %v358
    %v390 = vpack.c.bf16 %v361, %v360
    %v391 = vpack.c.bf16 %v363, %v362
    %v392 = vpack.c.bf16 %v365, %v364
    %v393 = vpack.c.bf16 %v367, %v366
    %v394 = vpack.c.bf16 %v369, %v368
    %v395 = vpack.c.bf16 %v371, %v370
    %396 = vset.pattern.permute.xlu0 1
    %397 = vperm.xlu0 %396, %v42
    %v398 = vpop.permute.xlu0 %397
    %400 = vset.pattern.permute.xlu0 1
    %401 = vperm.xlu0 %400, %v43
    %v402 = vpop.permute.xlu0 %401
    %404 = vset.pattern.permute.xlu0 1
    %405 = vperm.xlu0 %404, %v44
    %v406 = vpop.permute.xlu0 %405
    %408 = vset.pattern.permute.xlu0 1
    %409 = vperm.xlu0 %408, %v45
    %v410 = vpop.permute.xlu0 %409
    %412 = vset.pattern.permute.xlu0 1
    %413 = vperm.xlu0 %412, %v46
    %v414 = vpop.permute.xlu0 %413
    %416 = vset.pattern.permute.xlu0 1
    %417 = vperm.xlu0 %416, %v47
    %v418 = vpop.permute.xlu0 %417
    %420 = vset.pattern.permute.xlu0 1
    %421 = vperm.xlu0 %420, %v48
    %v422 = vpop.permute.xlu0 %421
    %424 = vset.pattern.permute.xlu0 1
    %425 = vperm.xlu0 %424, %v49
    %v426 = vpop.permute.xlu0 %425
    %428 = vset.pattern.permute.xlu0 1
    %429 = vperm.xlu0 %428, %v50
    %v430 = vpop.permute.xlu0 %429
    %432 = vset.pattern.permute.xlu0 1
    %433 = vperm.xlu0 %432, %v51
    %v434 = vpop.permute.xlu0 %433
    %436 = vset.pattern.permute.xlu0 1
    %437 = vperm.xlu0 %436, %v52
    %v438 = vpop.permute.xlu0 %437
    %440 = vset.pattern.permute.xlu0 1
    %441 = vperm.xlu0 %440, %v53
    %v442 = vpop.permute.xlu0 %441
    %444 = vset.pattern.permute.xlu0 1
    %445 = vperm.xlu0 %444, %v54
    %v446 = vpop.permute.xlu0 %445
    %448 = vset.pattern.permute.xlu0 1
    %449 = vperm.xlu0 %448, %v55
    %v450 = vpop.permute.xlu0 %449
    %452 = vset.pattern.permute.xlu0 1
    %453 = vperm.xlu0 %452, %v56
    %v454 = vpop.permute.xlu0 %453
    %456 = vset.pattern.permute.xlu0 1
    %457 = vperm.xlu0 %456, %v57
    %v458 = vpop.permute.xlu0 %457
    %v476 = vunpack.c.l.b16 %v372
    %v477 = vunpack.c.l.b16 %v373
    %v478 = vunpack.c.l.b16 %v374
    %v479 = vunpack.c.l.b16 %v375
    %v480 = vunpack.c.l.b16 %v376
    %v481 = vunpack.c.l.b16 %v377
    %v482 = vunpack.c.l.b16 %v378
    %v483 = vunpack.c.l.b16 %v379
    %v484 = vunpack.c.l.b16 %v380
    %v485 = vunpack.c.l.b16 %v381
    %v486 = vunpack.c.l.b16 %v382
    %v487 = vunpack.c.l.b16 %v383
    %v488 = vunpack.c.l.b16 %v384
    %v489 = vunpack.c.l.b16 %v385
    %v490 = vunpack.c.l.b16 %v386
    %v491 = vunpack.c.l.b16 %v387
    %v492 = vpack.c.b16 %v477, %v476
    %v493 = vpack.c.b16 %v479, %v478
    %v494 = vpack.c.b16 %v481, %v480
    %v495 = vpack.c.b16 %v483, %v482
    %v496 = vpack.c.b16 %v485, %v484
    %v497 = vpack.c.b16 %v487, %v486
    %v498 = vpack.c.b16 %v489, %v488
    %v499 = vpack.c.b16 %v491, %v490
    %508 = vmatpush.bf16.msra.mxu0 %v395
    %509 = vmatpush.bf16.msra.mxu0 %v394
    %510 = vmatpush.bf16.msra.mxu0 %v393
    %511 = vmatpush.bf16.msra.mxu0 %v392
    %512 = vmatpush.bf16.msra.mxu0 %v391
    %513 = vmatpush.bf16.msra.mxu0 %v390
    %514 = vmatpush.bf16.msra.mxu0 %v389
    %515 = vmatpush.bf16.msra.mxu0 %v388
    %516 = vmatmul.bf16.gmra.mxu0 %v492
    %v517 = vpop.f32.mrf.mxu0
    %v518 = vadd.f32 %v398, %v517
    %v519 = vpop.f32.mrf.mxu0
    %v520 = vadd.f32 %v402, %v519
    %521 = vmatmul.bf16.gmra.mxu0 %v493
    %v522 = vpop.f32.mrf.mxu0
    %v523 = vadd.f32 %v406, %v522
    %v524 = vpop.f32.mrf.mxu0
    %v525 = vadd.f32 %v410, %v524
    %526 = vmatmul.bf16.gmra.mxu0 %v494
    %v527 = vpop.f32.mrf.mxu0
    %v528 = vadd.f32 %v414, %v527
    %v529 = vpop.f32.mrf.mxu0
    %v530 = vadd.f32 %v418, %v529
    %531 = vmatmul.bf16.gmra.mxu0 %v495
    %v532 = vpop.f32.mrf.mxu0
    %v533 = vadd.f32 %v422, %v532
    %v534 = vpop.f32.mrf.mxu0
    %v535 = vadd.f32 %v426, %v534
    %536 = vmatmul.bf16.gmra.mxu0 %v496
    %v537 = vpop.f32.mrf.mxu0
    %v538 = vadd.f32 %v430, %v537
    %v539 = vpop.f32.mrf.mxu0
    %v540 = vadd.f32 %v434, %v539
    %541 = vmatmul.bf16.gmra.mxu0 %v497
    %v542 = vpop.f32.mrf.mxu0
    %v543 = vadd.f32 %v438, %v542
    %v544 = vpop.f32.mrf.mxu0
    %v545 = vadd.f32 %v442, %v544
    %546 = vmatmul.bf16.gmra.mxu0 %v498
    %v547 = vpop.f32.mrf.mxu0
    %v548 = vadd.f32 %v446, %v547
    %v549 = vpop.f32.mrf.mxu0
    %v550 = vadd.f32 %v450, %v549
    %551 = vmatmul.bf16.gmra.mxu0 %v499
    %v552 = vpop.f32.mrf.mxu0
    %v553 = vadd.f32 %v454, %v552
    %v554 = vpop.f32.mrf.mxu0
    %v555 = vadd.f32 %v458, %v554
    %556 = vdwg.mxu0
    %v557 = vmul.f32 %v518, 0.5
    %v558 = vmul.f32 %v520, 0.5
    %v559 = vmul.f32 %v523, 0.5
    %v560 = vmul.f32 %v525, 0.5
    %v561 = vmul.f32 %v528, 0.5
    %v562 = vmul.f32 %v530, 0.5
    %v563 = vmul.f32 %v533, 0.5
    %v564 = vmul.f32 %v535, 0.5
    %v565 = vmul.f32 %v538, 0.5
    %v566 = vmul.f32 %v540, 0.5
    %v567 = vmul.f32 %v543, 0.5
    %v568 = vmul.f32 %v545, 0.5
    %v569 = vmul.f32 %v548, 0.5
    %v570 = vmul.f32 %v550, 0.5
    %v571 = vmul.f32 %v553, 0.5
    %v572 = vmul.f32 %v555, 0.5
    %v573 = vtanh.pop %v557
    %v574 = vtanh.pop %v558
    %v575 = vtanh.pop %v559
    %v576 = vtanh.pop %v560
    %v577 = vtanh.pop %v561
    %v578 = vtanh.pop %v562
    %v579 = vtanh.pop %v563
    %v580 = vtanh.pop %v564
    %v581 = vtanh.pop %v565
    %v582 = vtanh.pop %v566
    %v583 = vtanh.pop %v567
    %v584 = vtanh.pop %v568
    %v585 = vtanh.pop %v569
    %v586 = vtanh.pop %v570
    %v587 = vtanh.pop %v571
    %v588 = vtanh.pop %v572
    %v589 = vmul.f32 %v573, 0.5
    %v590 = vmul.f32 %v574, 0.5
    %v591 = vmul.f32 %v575, 0.5
    %v592 = vmul.f32 %v576, 0.5
    %v593 = vmul.f32 %v577, 0.5
    %v594 = vmul.f32 %v578, 0.5
    %v595 = vmul.f32 %v579, 0.5
    %v596 = vmul.f32 %v580, 0.5
    %v597 = vmul.f32 %v581, 0.5
    %v598 = vmul.f32 %v582, 0.5
    %v599 = vmul.f32 %v583, 0.5
    %v600 = vmul.f32 %v584, 0.5
    %v601 = vmul.f32 %v585, 0.5
    %v602 = vmul.f32 %v586, 0.5
    %v603 = vmul.f32 %v587, 0.5
    %v604 = vmul.f32 %v588, 0.5
    %v605 = vadd.f32 %v589, 0.5
    %v606 = vadd.f32 %v590, 0.5
    %v607 = vadd.f32 %v591, 0.5
    %v608 = vadd.f32 %v592, 0.5
    %v609 = vadd.f32 %v593, 0.5
    %v610 = vadd.f32 %v594, 0.5
    %v611 = vadd.f32 %v595, 0.5
    %v612 = vadd.f32 %v596, 0.5
    %v613 = vadd.f32 %v597, 0.5
    %v614 = vadd.f32 %v598, 0.5
    %v615 = vadd.f32 %v599, 0.5
    %v616 = vadd.f32 %v600, 0.5
    %v617 = vadd.f32 %v601, 0.5
    %v618 = vadd.f32 %v602, 0.5
    %v619 = vadd.f32 %v603, 0.5
    %v620 = vadd.f32 %v604, 0.5
    %v621 = vmul.f32 %v518, %v605
    %v622 = vmul.f32 %v520, %v606
    %v623 = vmul.f32 %v523, %v607
    %v624 = vmul.f32 %v525, %v608
    %v625 = vmul.f32 %v528, %v609
    %v626 = vmul.f32 %v530, %v610
    %v627 = vmul.f32 %v533, %v611
    %v628 = vmul.f32 %v535, %v612
    %v629 = vmul.f32 %v538, %v613
    %v630 = vmul.f32 %v540, %v614
    %v631 = vmul.f32 %v543, %v615
    %v632 = vmul.f32 %v545, %v616
    %v633 = vmul.f32 %v548, %v617
    %v634 = vmul.f32 %v550, %v618
    %v635 = vmul.f32 %v553, %v619
    %v636 = vmul.f32 %v555, %v620
    %637 = vset.pattern.permute.xlu0 2
    %638 = vperm.xlu0 %637, %v42
    %v639 = vpop.permute.xlu0 %638
    %641 = vset.pattern.permute.xlu0 2
    %642 = vperm.xlu0 %641, %v43
    %v643 = vpop.permute.xlu0 %642
    %645 = vset.pattern.permute.xlu0 2
    %646 = vperm.xlu0 %645, %v44
    %v647 = vpop.permute.xlu0 %646
    %649 = vset.pattern.permute.xlu0 2
    %650 = vperm.xlu0 %649, %v45
    %v651 = vpop.permute.xlu0 %650
    %653 = vset.pattern.permute.xlu0 2
    %654 = vperm.xlu0 %653, %v46
    %v655 = vpop.permute.xlu0 %654
    %657 = vset.pattern.permute.xlu0 2
    %658 = vperm.xlu0 %657, %v47
    %v659 = vpop.permute.xlu0 %658
    %661 = vset.pattern.permute.xlu0 2
    %662 = vperm.xlu0 %661, %v48
    %v663 = vpop.permute.xlu0 %662
    %665 = vset.pattern.permute.xlu0 2
    %666 = vperm.xlu0 %665, %v49
    %v667 = vpop.permute.xlu0 %666
    %669 = vset.pattern.permute.xlu0 2
    %670 = vperm.xlu0 %669, %v50
    %v671 = vpop.permute.xlu0 %670
    %673 = vset.pattern.permute.xlu0 2
    %674 = vperm.xlu0 %673, %v51
    %v675 = vpop.permute.xlu0 %674
    %677 = vset.pattern.permute.xlu0 2
    %678 = vperm.xlu0 %677, %v52
    %v679 = vpop.permute.xlu0 %678
    %681 = vset.pattern.permute.xlu0 2
    %682 = vperm.xlu0 %681, %v53
    %v683 = vpop.permute.xlu0 %682
    %685 = vset.pattern.permute.xlu0 2
    %686 = vperm.xlu0 %685, %v54
    %v687 = vpop.permute.xlu0 %686
    %689 = vset.pattern.permute.xlu0 2
    %690 = vperm.xlu0 %689, %v55
    %v691 = vpop.permute.xlu0 %690
    %693 = vset.pattern.permute.xlu0 2
    %694 = vperm.xlu0 %693, %v56
    %v695 = vpop.permute.xlu0 %694
    %697 = vset.pattern.permute.xlu0 2
    %698 = vperm.xlu0 %697, %v57
    %v699 = vpop.permute.xlu0 %698
    %v701 = vmul.f32 %v621, %v639
    %v702 = vmul.f32 %v622, %v643
    %v703 = vmul.f32 %v623, %v647
    %v704 = vmul.f32 %v624, %v651
    %v705 = vmul.f32 %v625, %v655
    %v706 = vmul.f32 %v626, %v659
    %v707 = vmul.f32 %v627, %v663
    %v708 = vmul.f32 %v628, %v667
    %v709 = vmul.f32 %v629, %v671
    %v710 = vmul.f32 %v630, %v675
    %v711 = vmul.f32 %v631, %v679
    %v712 = vmul.f32 %v632, %v683
    %v713 = vmul.f32 %v633, %v687
    %v714 = vmul.f32 %v634, %v691
    %v715 = vmul.f32 %v635, %v695
    %v716 = vmul.f32 %v636, %v699
    %v717 = vadd.f32 %v701, %v702
    %v718 = vadd.f32 %v717, %v703
    %v719 = vadd.f32 %v718, %v704
    %v720 = vadd.f32 %v719, %v705
    %v721 = vadd.f32 %v720, %v706
    %v722 = vadd.f32 %v721, %v707
    %v723 = vadd.f32 %v722, %v708
    %v724 = vadd.f32 %v723, %v709
    %v725 = vadd.f32 %v724, %v710
    %v726 = vadd.f32 %v725, %v711
    %v727 = vadd.f32 %v726, %v712
    %v728 = vadd.f32 %v727, %v713
    %v729 = vadd.f32 %v728, %v714
    %v730 = vadd.f32 %v729, %v715
    %v731 = vadd.f32 %v730, %v716
    %v732 = vrot.slane %v731, 4
    %v733 = vadd.f32 %v731, %v732
    %v734 = vrot.slane %v733, 2
    %v735 = vadd.f32 %v733, %v734
    %v736 = vrot.slane %v735, 1
    %v737 = vadd.f32 %v735, %v736
    %738 = vset.pattern.permute.xlu0 3
    %739 = vperm.xlu0 %738, %v42
    %v740 = vpop.permute.xlu0 %739
    %v742 = vadd.f32 %v737, %v740
    %v743 = vtanh.pop %v742
    %744 = vst [vmem:[#allocation2] sm:$0x1] %v743
    // Predicated region
    $region18: #{tpu_custom_call.1} parent=1 // pred_check
      _
    $region19: #{tpu_custom_call.1} parent=1 // pred_check_branch
      %746 = sbr.rel (0) target = $region21
    $region20: #{tpu_custom_call.1} parent=1 // pred_region
      %748 = vsyncadd [#allocation3], 0
      %s750 = sshll.u32 [#allocation2], 4
      %s751 = int_to_ptr.vmem [resolvable:$true] %s750
      %s752 = sshll.u32 %s4, 4
      %s753 = int_to_ptr.hbm [resolvable:$true] %s752
      %755 = dma.vmem_to_hbm [thread:$0]  %s751, 16, %s753, [#allocation3]
    $region21: #{tpu_custom_call.1} parent=1 // pred_fallthru
      _
    // Predicated region
    $region22: #{tpu_custom_call.1} parent=1 // pred_check
      _
    $region23: #{tpu_custom_call.1} parent=1 // pred_check_branch
      %757 = sbr.rel (0) target = $region25
    $region24: #{tpu_custom_call.1} parent=1 // pred_region
      %759 = dma.done [#allocation3], 16
    $region25: #{tpu_custom_call.1} parent=1 // pred_fallthru
      _
    %760 = vsyncpa [#allocation3], 1

</llo_original>
